<compile_context>
chip_gen: v7x
topology: tpu7x:2x2x1
jax: 0.10.0
libtpu: 0.0.40
codegen_flags: <defaults>
</compile_context>

<pallas_src>
import functools

import jax
import jax.numpy as jnp
from jax.experimental import pallas as pl
from jax.experimental.pallas import tpu as pltpu

# ---------------- problem sizes (small, consistent with the module) ---------
NUM_AGE_GROUPS = 21            # len(age_groups)
NUM_SEX = 2                    # len(sex_categories)
OUT_DIM = NUM_AGE_GROUPS + NUM_SEX    # 23
OUT_PAD = 128                  # lane-dense padded output width
IN_FEATS = 10
HIDDEN = 32
OUT_FEATS = 16
NUM_INDIVIDUALS = 32           # synthetic graph size (reference graph is empty)
BATCH = 4                      # 4 graphs * 32 nodes = 128 packed MXU rows


# ---------------- Pallas kernel ---------------------------------------------
def gnn_kernel(a_ref, x_ref, w1_ref, b1_ref, w2f_ref, bff_ref, o_ref, *,
               num_age, out_dim):
    a = a_ref[...]            # [M, M]  block-diagonal normalized adjacency
    x = x_ref[...]            # [M, IN_FEATS]

    # ---- layer1 self_loop GraphConv + ReLU:  relu(A @ (X @ W1) + b1)
    xw = jnp.dot(x, w1_ref[...], preferred_element_type=jnp.float32)    # [M, HIDDEN]
    h1 = jnp.dot(a, xw, preferred_element_type=jnp.float32) + b1_ref[...]
    h1 = jnp.maximum(h1, 0.0)                                            # [M, HIDDEN]

    # ---- layer2 + folded final Linear:  A @ (h1 @ (W2 @ Wf)) + (b2 @ Wf + bf)
    #      (W2f / bff zero-padded to OUT_PAD lanes -> pad-lane logits are 0)
    hw = jnp.dot(h1, w2f_ref[...], preferred_element_type=jnp.float32)   # [M, OUT_PAD]
    logits = jnp.dot(a, hw, preferred_element_type=jnp.float32) + bff_ref[...]

    # ---- grouped softmax with lane masks (pad lanes excluded, output 0 there)
    col = jax.lax.broadcasted_iota(jnp.int32, logits.shape, 1)
    age_mask = col < num_age
    sex_mask = jnp.logical_and(col >= num_age, col < out_dim)
    valid = col < out_dim
    neg_inf = jnp.float32(-jnp.inf)
    # single shared max over all valid lanes (softmax is shift-invariant per group)
    m = jnp.max(jnp.where(valid, logits, neg_inf), axis=1, keepdims=True)
    e = jnp.exp(logits - m)
    s_age = jnp.sum(jnp.where(age_mask, e, 0.0), axis=1, keepdims=True)
    s_sex = jnp.sum(jnp.where(sex_mask, e, 0.0), axis=1, keepdims=True)
    inv_age = pl.reciprocal(s_age, approx=False)   # EUP; exact probabilities
    inv_sex = pl.reciprocal(s_sex, approx=False)
    o_ref[...] = jnp.where(age_mask, e * inv_age,
                           jnp.where(sex_mask, e * inv_sex, 0.0))


# ---------------- wrapper ----------------------------------------------------
def fold_and_pad_params(w2, b2, wf, bf):
    """Parameter preparation, done ONCE (not per forward call)."""
    w2f = jnp.dot(w2, wf)                 # [HIDDEN, OUT_DIM]
    bff = jnp.dot(b2, wf) + bf            # [1, OUT_DIM]
    w2f_pad = jnp.zeros((HIDDEN, OUT_PAD), jnp.float32).at[:, :OUT_DIM].set(w2f)
    bff_pad = jnp.zeros((1, OUT_PAD), jnp.float32).at[:, :OUT_DIM].set(bff)
    return w2f_pad, bff_pad


def pack_block_diag(a_batch):
    """[B, N, N] -> [B*N, B*N] block-diagonal (graphs stay independent)."""
    b, n, _ = a_batch.shape
    big = jnp.zeros((b * n, b * n), jnp.float32)
    for i in range(b):
        big = big.at[i * n:(i + 1) * n, i * n:(i + 1) * n].set(a_batch[i])
    return big


@functools.partial(jax.jit, static_argnames=())
def gnn_forward(a_batch, x_batch, w1, b1, w2f_pad, bff_pad):
    """a_batch: [B, N, N], x_batch: [B, N, IN_FEATS] -> [B, N, OUT_DIM]."""
    b, n, _ = a_batch.shape
    a_packed = pack_block_diag(a_batch)                      # [B*N, B*N]
    x_packed = x_batch.reshape(b * n, IN_FEATS)              # [B*N, IN_FEATS]

    kernel = functools.partial(gnn_kernel, num_age=NUM_AGE_GROUPS, out_dim=OUT_DIM)
    out_pad = pl.pallas_call(
        kernel,
        out_shape=jax.ShapeDtypeStruct((b * n, OUT_PAD), jnp.float32),
        # single kernel step: whole (small) operands resident in VMEM
        in_specs=[pl.BlockSpec(memory_space=pltpu.MemorySpace.VMEM)] * 6,
        out_specs=pl.BlockSpec(memory_space=pltpu.MemorySpace.VMEM),
    )(a_packed, x_packed, w1, b1, w2f_pad, bff_pad)

    return out_pad[:, :OUT_DIM].reshape(b, n, OUT_DIM)


# ---------------- glue: synthetic graphs + deterministic parameters ---------
def build_self_loop_adjacency(n, offset=1):
    """Dense DGL-style 'both'-normalized adjacency for the self_loop relation.

    Synthetic edges: i -> i (the self loop) plus i -> (i + offset) % n so the
    degree normalization is non-trivial.  A[dst, src] = 1.
    """
    src = jnp.concatenate([jnp.arange(n), jnp.arange(n)])
    dst = jnp.concatenate([jnp.arange(n), (jnp.arange(n) + offset) % n])
    a = jnp.zeros((n, n), jnp.float32).at[dst, src].add(1.0)
    out_deg = jnp.maximum(a.sum(axis=0), 1.0)   # out-degree of src
    in_deg = jnp.maximum(a.sum(axis=1), 1.0)    # in-degree of dst
    return (in_deg[:, None] ** -0.5) * a * (out_deg[None, :] ** -0.5)


def init_params(key):
    ks = jax.random.split(key, 10)
    # individual embeddings: nn.Parameter(torch.randn(N, in_feats))
    x = jax.random.normal(ks[0], (NUM_INDIVIDUALS, IN_FEATS), jnp.float32)
    # age / sex embeddings exist in the module but never reach the returned
    # 'individual' tensor; kept only for shape fidelity.
    _age_emb = jax.random.normal(ks[1], (NUM_AGE_GROUPS, IN_FEATS), jnp.float32)
    _sex_emb = jax.random.normal(ks[2], (NUM_SEX, IN_FEATS), jnp.float32)
    # GraphConv('self_loop') weights of layer1 / layer2
    w1 = jax.random.normal(ks[3], (IN_FEATS, HIDDEN), jnp.float32) * 0.1
    b1 = jax.random.normal(ks[4], (1, HIDDEN), jnp.float32) * 0.1
    w2 = jax.random.normal(ks[5], (HIDDEN, OUT_FEATS), jnp.float32) * 0.1
    b2 = jax.random.normal(ks[6], (1, OUT_FEATS), jnp.float32) * 0.1
    # final nn.Linear(out_feats, 23)  (stored pre-transposed: [out_feats, 23])
    wf = jax.random.normal(ks[7], (OUT_FEATS, OUT_DIM), jnp.float32) * 0.1
    bf = jax.random.normal(ks[8], (1, OUT_DIM), jnp.float32) * 0.1
    return x, w1, b1, w2, b2, wf, bf


def reference_forward(a_norm, x, w1, b1, w2, b2, wf, bf):
    """Un-folded reference (matches the PyTorch module path exactly)."""
    h1 = jnp.maximum(a_norm @ (x @ w1) + b1, 0.0)
    h2 = a_norm @ (h1 @ w2) + b2
    logits = h2 @ wf + bf
    age = jax.nn.softmax(logits[:, :NUM_AGE_GROUPS], axis=1)
    sex = jax.nn.softmax(logits[:, NUM_AGE_GROUPS:], axis=1)
    return jnp.concatenate([age, sex], axis=1)


if __name__ == "__main__":
    key = jax.random.PRNGKey(0)
    x, w1, b1, w2, b2, wf, bf = init_params(key)
    w2f_pad, bff_pad = fold_and_pad_params(w2, b2, wf, bf)   # once, offline

    # Batch of BATCH synthetic graphs sharing the model's embeddings.
    a_batch = jnp.stack(
        [build_self_loop_adjacency(NUM_INDIVIDUALS, offset=o)
         for o in (1, 2, 3, 4)])                              # [4, 32, 32]
    x_batch = jnp.broadcast_to(x, (BATCH, NUM_INDIVIDUALS, IN_FEATS))

    out = gnn_forward(a_batch, x_batch, w1, b1, w2f_pad, bff_pad)
    out = jax.block_until_ready(out)

    ref = jax.vmap(
        lambda a, xx: reference_forward(a, xx, w1, b1, w2, b2, wf, bf)
    )(a_batch, x_batch)

    assert out.shape == (BATCH, NUM_INDIVIDUALS, OUT_DIM)
    assert jnp.allclose(out, ref, atol=2e-3, rtol=2e-3)
    # per-group softmax rows each sum to ~1 (total ~2 per row)
    assert jnp.allclose(out.sum(axis=-1), 2.0, atol=2e-3)

    print("KERNEL_OK")
</pallas_src>

<mosaic_0001>
module attributes {stable_mosaic.version = 11 : i64} {
  func.func @gnn_kernel(%arg0: memref<128x128xf32, #tpu.memory_space<vmem>>, %arg1: memref<128x10xf32, #tpu.memory_space<vmem>>, %arg2: memref<10x32xf32, #tpu.memory_space<vmem>>, %arg3: memref<1x32xf32, #tpu.memory_space<vmem>>, %arg4: memref<32x128xf32, #tpu.memory_space<vmem>>, %arg5: memref<1x128xf32, #tpu.memory_space<vmem>>, %arg6: memref<128x128xf32, #tpu.memory_space<vmem>>) attributes {dimension_semantics = [], scalar_prefetch = 0 : i64, scratch_operands = 0 : i64, tpu.core_type = #tpu.core_type<tc>} {
    %c0 = arith.constant 0 : index
    %c0_0 = arith.constant 0 : index
    %0 = vector.load %arg0[%c0, %c0_0] : memref<128x128xf32, #tpu.memory_space<vmem>>, vector<128x128xf32>
    %c0_1 = arith.constant 0 : index
    %c0_2 = arith.constant 0 : index
    %1 = vector.load %arg1[%c0_1, %c0_2] : memref<128x10xf32, #tpu.memory_space<vmem>>, vector<128x10xf32>
    %c0_3 = arith.constant 0 : index
    %c0_4 = arith.constant 0 : index
    %2 = vector.load %arg2[%c0_3, %c0_4] : memref<10x32xf32, #tpu.memory_space<vmem>>, vector<10x32xf32>
    %cst = arith.constant dense<0.000000e+00> : vector<128x32xf32>
    %3 = tpu.matmul %1, %2, %cst {dimension_numbers = #tpu.dot_dimension_numbers<[1], [0], [0], [1], [0, 0, 1, 1], [], []>} : vector<128x10xf32>, vector<10x32xf32>, vector<128x32xf32> -> vector<128x32xf32>
    %cst_5 = arith.constant dense<0.000000e+00> : vector<128x32xf32>
    %4 = tpu.matmul %0, %3, %cst_5 {dimension_numbers = #tpu.dot_dimension_numbers<[1], [0], [0], [1], [0, 0, 1, 1], [], []>} : vector<128x128xf32>, vector<128x32xf32>, vector<128x32xf32> -> vector<128x32xf32>
    %c0_6 = arith.constant 0 : index
    %c0_7 = arith.constant 0 : index
    %5 = vector.load %arg3[%c0_6, %c0_7] : memref<1x32xf32, #tpu.memory_space<vmem>>, vector<1x32xf32>
    %6 = vector.broadcast %5 : vector<1x32xf32> to vector<128x32xf32>
    %7 = arith.addf %4, %6 : vector<128x32xf32>
    %cst_8 = arith.constant 0.000000e+00 : f32
    %8 = vector.broadcast %cst_8 : f32 to vector<128x32xf32>
    %9 = arith.maximumf %7, %8 : vector<128x32xf32>
    %c0_9 = arith.constant 0 : index
    %c0_10 = arith.constant 0 : index
    %10 = vector.load %arg4[%c0_9, %c0_10] : memref<32x128xf32, #tpu.memory_space<vmem>>, vector<32x128xf32>
    %cst_11 = arith.constant dense<0.000000e+00> : vector<128x128xf32>
    %11 = tpu.matmul %9, %10, %cst_11 {dimension_numbers = #tpu.dot_dimension_numbers<[1], [0], [0], [1], [0, 0, 1, 1], [], []>} : vector<128x32xf32>, vector<32x128xf32>, vector<128x128xf32> -> vector<128x128xf32>
    %cst_12 = arith.constant dense<0.000000e+00> : vector<128x128xf32>
    %12 = tpu.matmul %0, %11, %cst_12 {dimension_numbers = #tpu.dot_dimension_numbers<[1], [0], [0], [1], [0, 0, 1, 1], [], []>} : vector<128x128xf32>, vector<128x128xf32>, vector<128x128xf32> -> vector<128x128xf32>
    %c0_13 = arith.constant 0 : index
    %c0_14 = arith.constant 0 : index
    %13 = vector.load %arg5[%c0_13, %c0_14] : memref<1x128xf32, #tpu.memory_space<vmem>>, vector<1x128xf32>
    %14 = vector.broadcast %13 : vector<1x128xf32> to vector<128x128xf32>
    %15 = arith.addf %12, %14 : vector<128x128xf32>
    %16 = tpu.iota {dimensions = array<i32: 1>} : vector<128x128xi32>
    %c21_i32 = arith.constant 21 : i32
    %17 = vector.broadcast %c21_i32 : i32 to vector<128x128xi32>
    %18 = arith.cmpi slt, %16, %17 : vector<128x128xi32>
    %c21_i32_15 = arith.constant 21 : i32
    %19 = vector.broadcast %c21_i32_15 : i32 to vector<128x128xi32>
    %20 = arith.cmpi sge, %16, %19 : vector<128x128xi32>
    %c23_i32 = arith.constant 23 : i32
    %21 = vector.broadcast %c23_i32 : i32 to vector<128x128xi32>
    %22 = arith.cmpi slt, %16, %21 : vector<128x128xi32>
    %23 = arith.andi %20, %22 : vector<128x128xi1>
    %c23_i32_16 = arith.constant 23 : i32
    %24 = vector.broadcast %c23_i32_16 : i32 to vector<128x128xi32>
    %25 = arith.cmpi slt, %16, %24 : vector<128x128xi32>
    %cst_17 = arith.constant 0xFF800000 : f32
    %26 = vector.broadcast %cst_17 : f32 to vector<128x128xf32>
    %27 = arith.select %25, %15, %26 : vector<128x128xi1>, vector<128x128xf32>
    %cst_18 = arith.constant dense<0xFF800000> : vector<128xf32>
    %28 = vector.multi_reduction <maximumf>, %27, %cst_18 [1] : vector<128x128xf32> to vector<128xf32>
    %29 = vector.shape_cast %28 : vector<128xf32> to vector<128x1xf32>
    %30 = vector.broadcast %29 : vector<128x1xf32> to vector<128x128xf32>
    %31 = arith.subf %15, %30 : vector<128x128xf32>
    %32 = math.exp %31 : vector<128x128xf32>
    %cst_19 = arith.constant 0.000000e+00 : f32
    %33 = vector.broadcast %cst_19 : f32 to vector<128x128xf32>
    %34 = arith.select %18, %32, %33 : vector<128x128xi1>, vector<128x128xf32>
    %cst_20 = arith.constant dense<0.000000e+00> : vector<128xf32>
    %35 = vector.multi_reduction <add>, %34, %cst_20 [1] : vector<128x128xf32> to vector<128xf32>
    %36 = vector.shape_cast %35 : vector<128xf32> to vector<128x1xf32>
    %cst_21 = arith.constant 0.000000e+00 : f32
    %37 = vector.broadcast %cst_21 : f32 to vector<128x128xf32>
    %38 = arith.select %23, %32, %37 : vector<128x128xi1>, vector<128x128xf32>
    %cst_22 = arith.constant dense<0.000000e+00> : vector<128xf32>
    %39 = vector.multi_reduction <add>, %38, %cst_22 [1] : vector<128x128xf32> to vector<128xf32>
    %40 = vector.shape_cast %39 : vector<128xf32> to vector<128x1xf32>
    %41 = tpu.reciprocal %36 : vector<128x1xf32> -> vector<128x1xf32>
    %42 = tpu.reciprocal %40 : vector<128x1xf32> -> vector<128x1xf32>
    %43 = vector.broadcast %41 : vector<128x1xf32> to vector<128x128xf32>
    %44 = arith.mulf %32, %43 : vector<128x128xf32>
    %45 = vector.broadcast %42 : vector<128x1xf32> to vector<128x128xf32>
    %46 = arith.mulf %32, %45 : vector<128x128xf32>
    %cst_23 = arith.constant 0.000000e+00 : f32
    %47 = vector.broadcast %cst_23 : f32 to vector<128x128xf32>
    %48 = arith.select %23, %46, %47 : vector<128x128xi1>, vector<128x128xf32>
    %49 = arith.select %18, %44, %48 : vector<128x128xi1>, vector<128x128xf32>
    %c0_24 = arith.constant 0 : index
    %c0_25 = arith.constant 0 : index
    %50 = vector.load %arg6[%c0_24, %c0_25] : memref<128x128xf32, #tpu.memory_space<vmem>>, vector<128x128xf32>
    tpu.vector_store %arg6[%c0_24, %c0_25], %49 {strides = array<i32>} : memref<128x128xf32, #tpu.memory_space<vmem>>, vector<128x128xf32>,
    return
  }
}

</mosaic_0001>

<llo_original>
// kernel: gnn_forward.1
$region0: #{gnn_forward.1}
  #allocation0 [shape = 'u32[]', space=smem, size = 0x4, offset = 0x4, fixed_abs, tag = 'smem constant byte address 0x4 - core index']
  #allocation1 [shape = 'u32[144,128]{1,0:T(1,128)}', space=vmem, size = 0x12000, scoped, tag = 'internal scratch']
  %s0 = inlined_call_operand.vmem [shape: f32[128,128], index: 0, kind: input, shape index: {}]
  %s1 = inlined_call_operand.vmem [shape: f32[128,10], index: 1, kind: input, shape index: {}]
  %s2 = inlined_call_operand.vmem [shape: f32[10,32], index: 2, kind: input, shape index: {}]
  %s3 = inlined_call_operand.vmem [shape: f32[1,32], index: 3, kind: input, shape index: {}]
  %s4 = inlined_call_operand.vmem [shape: f32[32,128], index: 4, kind: input, shape index: {}]
  %s5 = inlined_call_operand.vmem [shape: f32[1,128], index: 5, kind: input, shape index: {}]
  %s6 = inlined_call_operand.vmem [shape: f32[128,128], index: 6, kind: output, shape index: {}]
  %s7 = sld [smem:[#allocation0]]
  $region34: #{gnn_forward.1} parent=0
    _
  %s9 = ssub.s32 1, %s7
  %s10 = scalar_select 0, %s9, %s7
  // Predicated region
  $region2: #{gnn_forward.1} parent=0 // pred_check
    _
  $region3: #{gnn_forward.1} parent=0 // pred_check_branch
    %12 = sbr.rel (0) target = $region5
  $region4: #{gnn_forward.1} parent=0 // pred_region
    _
  $region5: #{gnn_forward.1} parent=0 // pred_fallthru
    _
  // Predicated region
  $region6: #{gnn_forward.1} parent=0 // pred_check
    _
  $region7: #{gnn_forward.1} parent=0 // pred_check_branch
    %14 = sbr.rel (0) target = $region9
  $region8: #{gnn_forward.1} parent=0 // pred_region
    _
  $region9: #{gnn_forward.1} parent=0 // pred_fallthru
    _
  // Predicated region
  $region10: #{gnn_forward.1} parent=0 // pred_check
    _
  $region11: #{gnn_forward.1} parent=0 // pred_check_branch
    %16 = sbr.rel (0) target = $region13
  $region12: #{gnn_forward.1} parent=0 // pred_region
    _
  $region13: #{gnn_forward.1} parent=0 // pred_fallthru
    _
  // Predicated region
  $region14: #{gnn_forward.1} parent=0 // pred_check
    _
  $region15: #{gnn_forward.1} parent=0 // pred_check_branch
    %18 = sbr.rel (0) target = $region17
  $region16: #{gnn_forward.1} parent=0 // pred_region
    _
  $region17: #{gnn_forward.1} parent=0 // pred_fallthru
    _
  // Predicated region
  $region18: #{gnn_forward.1} parent=0 // pred_check
    _
  $region19: #{gnn_forward.1} parent=0 // pred_check_branch
    %20 = sbr.rel (0) target = $region21
  $region20: #{gnn_forward.1} parent=0 // pred_region
    _
  $region21: #{gnn_forward.1} parent=0 // pred_fallthru
    _
  // Predicated region
  $region22: #{gnn_forward.1} parent=0 // pred_check
    _
  $region23: #{gnn_forward.1} parent=0 // pred_check_branch
    %22 = sbr.rel (0) target = $region25
  $region24: #{gnn_forward.1} parent=0 // pred_region
    _
  $region25: #{gnn_forward.1} parent=0 // pred_fallthru
    _
  %v23 = vld [vmem:[%s0] sm:$0xff]
  %v24 = vld [vmem:[%s0 + $0x8] sm:$0xff]
  %v25 = vld [vmem:[%s0 + $0x10] sm:$0xff]
  %v26 = vld [vmem:[%s0 + $0x18] sm:$0xff]
  %v27 = vld [vmem:[%s0 + $0x20] sm:$0xff]
  %v28 = vld [vmem:[%s0 + $0x28] sm:$0xff]
  %v29 = vld [vmem:[%s0 + $0x30] sm:$0xff]
  %v30 = vld [vmem:[%s0 + $0x38] sm:$0xff]
  %v31 = vld [vmem:[%s0 + $0x40] sm:$0xff]
  %v32 = vld [vmem:[%s0 + $0x48] sm:$0xff]
  %v33 = vld [vmem:[%s0 + $0x50] sm:$0xff]
  %v34 = vld [vmem:[%s0 + $0x58] sm:$0xff]
  %v35 = vld [vmem:[%s0 + $0x60] sm:$0xff]
  %v36 = vld [vmem:[%s0 + $0x68] sm:$0xff]
  %v37 = vld [vmem:[%s0 + $0x70] sm:$0xff]
  %v38 = vld [vmem:[%s0 + $0x78] sm:$0xff]
  %v39 = vld [vmem:[%s1] sm:$0xff]
  %v40 = vld [vmem:[%s1 + $0x8] sm:$0xff]
  %v41 = vld [vmem:[%s1 + $0x10] sm:$0xff]
  %v42 = vld [vmem:[%s1 + $0x18] sm:$0xff]
  %v43 = vld [vmem:[%s1 + $0x20] sm:$0xff]
  %v44 = vld [vmem:[%s1 + $0x28] sm:$0xff]
  %v45 = vld [vmem:[%s1 + $0x30] sm:$0xff]
  %v46 = vld [vmem:[%s1 + $0x38] sm:$0xff]
  %v47 = vld [vmem:[%s1 + $0x40] sm:$0xff]
  %v48 = vld [vmem:[%s1 + $0x48] sm:$0xff]
  %v49 = vld [vmem:[%s1 + $0x50] sm:$0xff]
  %v50 = vld [vmem:[%s1 + $0x58] sm:$0xff]
  %v51 = vld [vmem:[%s1 + $0x60] sm:$0xff]
  %v52 = vld [vmem:[%s1 + $0x68] sm:$0xff]
  %v53 = vld [vmem:[%s1 + $0x70] sm:$0xff]
  %v54 = vld [vmem:[%s1 + $0x78] sm:$0xff]
  %v55 = vld [vmem:[%s2] sm:$0xff]
  %v56 = vld [vmem:[%s2 + $0x8] sm:$0x3]
  %vm57 = vcmask 80896
  %v59 = vsel %vm57, %v39, 0
  %v62 = vsel %vm57, %v40, 0
  %v65 = vsel %vm57, %v41, 0
  %v68 = vsel %vm57, %v42, 0
  %v71 = vsel %vm57, %v43, 0
  %v74 = vsel %vm57, %v44, 0
  %v77 = vsel %vm57, %v45, 0
  %v80 = vsel %vm57, %v46, 0
  %v83 = vsel %vm57, %v47, 0
  %v86 = vsel %vm57, %v48, 0
  %v89 = vsel %vm57, %v49, 0
  %v92 = vsel %vm57, %v50, 0
  %v95 = vsel %vm57, %v51, 0
  %v98 = vsel %vm57, %v52, 0
  %v101 = vsel %vm57, %v53, 0
  %v104 = vsel %vm57, %v54, 0
  %vm106 = vcmask 1041408
  %v108 = vsel %vm106, %v56, 0
  %110 = vmatprep.subr.mxu0 0.0
  %111 = vmatpush1.msra.mxu0 %v55
  %112 = vmatprep.subr.mxu0 0.0
  %113 = vmatpush1.msra.mxu0 %v108
  %114 = vmatprep.subr.mxu0 0.0
  %115 = vmatpush1.msra.mxu0 0.0
  %116 = vmatprep.subr.mxu0 0.0
  %117 = vmatpush1.msra.mxu0 0.0
  %118 = vmatprep.subr.mxu0 0.0
  %119 = vmatpush1.msra.mxu0 0.0
  %120 = vmatprep.subr.mxu0 0.0
  %121 = vmatpush1.msra.mxu0 0.0
  %122 = vmatprep.subr.mxu0 0.0
  %123 = vmatpush1.msra.mxu0 0.0
  %124 = vmatprep.subr.mxu0 0.0
  %125 = vmatpush1.msra.mxu0 0.0
  %126 = vmatprep.subr.mxu0 0.0
  %127 = vmatpush1.msra.mxu0 0.0
  %128 = vmatprep.subr.mxu0 0.0
  %129 = vmatpush1.msra.mxu0 0.0
  %130 = vmatprep.subr.mxu0 0.0
  %131 = vmatpush1.msra.mxu0 0.0
  %132 = vmatprep.subr.mxu0 0.0
  %133 = vmatpush1.msra.mxu0 0.0
  %134 = vmatprep.subr.mxu0 0.0
  %135 = vmatpush1.msra.mxu0 0.0
  %136 = vmatprep.subr.mxu0 0.0
  %137 = vmatpush1.msra.mxu0 0.0
  %138 = vmatprep.subr.mxu0 0.0
  %139 = vmatpush1.msra.mxu0 0.0
  %140 = vmatprep.subr.mxu0 0.0
  %141 = vmatpush1.msra.mxu0 0.0
  %142 = vmatprep.subr.mxu0 0.0
  %143 = vmatpush1.msra.mxu0 0.0
  %144 = vmatprep.subr.mxu0 0.0
  %145 = vmatpush1.msra.mxu0 0.0
  %146 = vmatprep.subr.mxu0 0.0
  %147 = vmatpush1.msra.mxu0 0.0
  %148 = vmatprep.subr.mxu0 0.0
  %149 = vmatpush1.msra.mxu0 0.0
  %150 = vmatprep.subr.mxu0 0.0
  %151 = vmatpush1.msra.mxu0 0.0
  %152 = vmatprep.subr.mxu0 0.0
  %153 = vmatpush1.msra.mxu0 0.0
  %154 = vmatprep.subr.mxu0 0.0
  %155 = vmatpush1.msra.mxu0 0.0
  %156 = vmatprep.subr.mxu0 0.0
  %157 = vmatpush1.msra.mxu0 0.0
  %158 = vmatprep.subr.mxu0 0.0
  %159 = vmatpush1.msra.mxu0 0.0
  %160 = vmatprep.subr.mxu0 0.0
  %161 = vmatpush1.msra.mxu0 0.0
  %162 = vmatprep.subr.mxu0 0.0
  %163 = vmatpush1.msra.mxu0 0.0
  %164 = vmatprep.subr.mxu0 0.0
  %165 = vmatpush1.msra.mxu0 0.0
  %166 = vmatprep.subr.mxu0 0.0
  %167 = vmatpush1.msra.mxu0 0.0
  %168 = vmatprep.subr.mxu0 0.0
  %169 = vmatpush1.msra.mxu0 0.0
  %170 = vmatprep.subr.mxu0 0.0
  %171 = vmatpush1.msra.mxu0 0.0
  %172 = vmatprep.subr.mxu0 0.0
  %173 = vmatpush1.msra.mxu0 0.0
  %174 = vmatprep.mubr.f32.mxu0 0.0
  %175 = vmatmul.mubr.f32.gmra.mrb[0].mxu0 %v59
  %v176 = vpop.f32.mrb[0].mxu0
  %v177 = vadd.f32 0.0, %v176
  %v178 = vpop.f32.mrb[0].mxu0
  %179 = vmatprep.mubr.f32.mxu0 0.0
  %180 = vmatmul.mubr.f32.gmra.mrb[0].mxu0 %v62
  %v181 = vpop.f32.mrb[0].mxu0
  %v182 = vadd.f32 0.0, %v181
  %v183 = vpop.f32.mrb[0].mxu0
  %184 = vmatprep.mubr.f32.mxu0 0.0
  %185 = vmatmul.mubr.f32.gmra.mrb[0].mxu0 %v65
  %v186 = vpop.f32.mrb[0].mxu0
  %v187 = vadd.f32 0.0, %v186
  %v188 = vpop.f32.mrb[0].mxu0
  %189 = vmatprep.mubr.f32.mxu0 0.0
  %190 = vmatmul.mubr.f32.gmra.mrb[0].mxu0 %v68
  %v191 = vpop.f32.mrb[0].mxu0
  %v192 = vadd.f32 0.0, %v191
  %v193 = vpop.f32.mrb[0].mxu0
  %194 = vmatprep.mubr.f32.mxu0 0.0
  %195 = vmatmul.mubr.f32.gmra.mrb[0].mxu0 %v71
  %v196 = vpop.f32.mrb[0].mxu0
  %v197 = vadd.f32 0.0, %v196
  %v198 = vpop.f32.mrb[0].mxu0
  %199 = vmatprep.mubr.f32.mxu0 0.0
  %200 = vmatmul.mubr.f32.gmra.mrb[0].mxu0 %v74
  %v201 = vpop.f32.mrb[0].mxu0
  %v202 = vadd.f32 0.0, %v201
  %v203 = vpop.f32.mrb[0].mxu0
  %204 = vmatprep.mubr.f32.mxu0 0.0
  %205 = vmatmul.mubr.f32.gmra.mrb[0].mxu0 %v77
  %v206 = vpop.f32.mrb[0].mxu0
  %v207 = vadd.f32 0.0, %v206
  %v208 = vpop.f32.mrb[0].mxu0
  %209 = vmatprep.mubr.f32.mxu0 0.0
  %210 = vmatmul.mubr.f32.gmra.mrb[0].mxu0 %v80
  %v211 = vpop.f32.mrb[0].mxu0
  %v212 = vadd.f32 0.0, %v211
  %v213 = vpop.f32.mrb[0].mxu0
  %214 = vmatprep.mubr.f32.mxu0 0.0
  %215 = vmatmul.mubr.f32.gmra.mrb[0].mxu0 %v83
  %v216 = vpop.f32.mrb[0].mxu0
  %v217 = vadd.f32 0.0, %v216
  %v218 = vpop.f32.mrb[0].mxu0
  %219 = vmatprep.mubr.f32.mxu0 0.0
  %220 = vmatmul.mubr.f32.gmra.mrb[0].mxu0 %v86
  %v221 = vpop.f32.mrb[0].mxu0
  %v222 = vadd.f32 0.0, %v221
  %v223 = vpop.f32.mrb[0].mxu0
  %224 = vmatprep.mubr.f32.mxu0 0.0
  %225 = vmatmul.mubr.f32.gmra.mrb[0].mxu0 %v89
  %v226 = vpop.f32.mrb[0].mxu0
  %v227 = vadd.f32 0.0, %v226
  %v228 = vpop.f32.mrb[0].mxu0
  %229 = vmatprep.mubr.f32.mxu0 0.0
  %230 = vmatmul.mubr.f32.gmra.mrb[0].mxu0 %v92
  %v231 = vpop.f32.mrb[0].mxu0
  %v232 = vadd.f32 0.0, %v231
  %v233 = vpop.f32.mrb[0].mxu0
  %234 = vmatprep.mubr.f32.mxu0 0.0
  %235 = vmatmul.mubr.f32.gmra.mrb[0].mxu0 %v95
  %v236 = vpop.f32.mrb[0].mxu0
  %v237 = vadd.f32 0.0, %v236
  %v238 = vpop.f32.mrb[0].mxu0
  %239 = vmatprep.mubr.f32.mxu0 0.0
  %240 = vmatmul.mubr.f32.gmra.mrb[0].mxu0 %v98
  %v241 = vpop.f32.mrb[0].mxu0
  %v242 = vadd.f32 0.0, %v241
  %v243 = vpop.f32.mrb[0].mxu0
  %244 = vmatprep.mubr.f32.mxu0 0.0
  %245 = vmatmul.mubr.f32.gmra.mrb[0].mxu0 %v101
  %v246 = vpop.f32.mrb[0].mxu0
  %v247 = vadd.f32 0.0, %v246
  %v248 = vpop.f32.mrb[0].mxu0
  %249 = vmatprep.mubr.f32.mxu0 0.0
  %250 = vmatmul.mubr.f32.gmra.mrb[0].mxu0 %v104
  %v251 = vpop.f32.mrb[0].mxu0
  %v252 = vadd.f32 0.0, %v251
  %v253 = vpop.f32.mrb[0].mxu0
  %254 = vdwg.mxu0
  %v255 = vld [vmem:[%s3] sm:$0x1]
  %v257 = vlaneseq
  %v258 = vshrl.u32 %v257, 7
  %v259 = vsub.s32 0, %v258
  %v260 = vrot.slane %v255, %v259
  %262 = vmatprep.subr.mxu0 0.0
  %263 = vmatpush1.msra.mxu0 %v177
  %264 = vmatprep.subr.mxu0 0.0
  %265 = vmatpush1.msra.mxu0 %v182
  %266 = vmatprep.subr.mxu0 0.0
  %267 = vmatpush1.msra.mxu0 %v187
  %268 = vmatprep.subr.mxu0 0.0
  %269 = vmatpush1.msra.mxu0 %v192
  %270 = vmatprep.subr.mxu0 0.0
  %271 = vmatpush1.msra.mxu0 %v197
  %272 = vmatprep.subr.mxu0 0.0
  %273 = vmatpush1.msra.mxu0 %v202
  %274 = vmatprep.subr.mxu0 0.0
  %275 = vmatpush1.msra.mxu0 %v207
  %276 = vmatprep.subr.mxu0 0.0
  %277 = vmatpush1.msra.mxu0 %v212
  %278 = vmatprep.subr.mxu0 0.0
  %279 = vmatpush1.msra.mxu0 %v217
  %280 = vmatprep.subr.mxu0 0.0
  %281 = vmatpush1.msra.mxu0 %v222
  %282 = vmatprep.subr.mxu0 0.0
  %283 = vmatpush1.msra.mxu0 %v227
  %284 = vmatprep.subr.mxu0 0.0
  %285 = vmatpush1.msra.mxu0 %v232
  %286 = vmatprep.subr.mxu0 0.0
  %287 = vmatpush1.msra.mxu0 %v237
  %288 = vmatprep.subr.mxu0 0.0
  %289 = vmatpush1.msra.mxu0 %v242
  %290 = vmatprep.subr.mxu0 0.0
  %291 = vmatpush1.msra.mxu0 %v247
  %292 = vmatprep.subr.mxu0 0.0
  %293 = vmatpush1.msra.mxu0 %v252
  %294 = vmatprep.subr.mxu0 0.0
  %295 = vmatpush1.msra.mxu0 0.0
  %296 = vmatprep.subr.mxu0 0.0
  %297 = vmatpush1.msra.mxu0 0.0
  %298 = vmatprep.subr.mxu0 0.0
  %299 = vmatpush1.msra.mxu0 0.0
  %300 = vmatprep.subr.mxu0 0.0
  %301 = vmatpush1.msra.mxu0 0.0
  %302 = vmatprep.subr.mxu0 0.0
  %303 = vmatpush1.msra.mxu0 0.0
  %304 = vmatprep.subr.mxu0 0.0
  %305 = vmatpush1.msra.mxu0 0.0
  %306 = vmatprep.subr.mxu0 0.0
  %307 = vmatpush1.msra.mxu0 0.0
  %308 = vmatprep.subr.mxu0 0.0
  %309 = vmatpush1.msra.mxu0 0.0
  %310 = vmatprep.subr.mxu0 0.0
  %311 = vmatpush1.msra.mxu0 0.0
  %312 = vmatprep.subr.mxu0 0.0
  %313 = vmatpush1.msra.mxu0 0.0
  %314 = vmatprep.subr.mxu0 0.0
  %315 = vmatpush1.msra.mxu0 0.0
  %316 = vmatprep.subr.mxu0 0.0
  %317 = vmatpush1.msra.mxu0 0.0
  %318 = vmatprep.subr.mxu0 0.0
  %319 = vmatpush1.msra.mxu0 0.0
  %320 = vmatprep.subr.mxu0 0.0
  %321 = vmatpush1.msra.mxu0 0.0
  %322 = vmatprep.subr.mxu0 0.0
  %323 = vmatpush1.msra.mxu0 0.0
  %324 = vmatprep.subr.mxu0 0.0
  %325 = vmatpush1.msra.mxu0 0.0
  %326 = vmatprep.mubr.f32.mxu0 0.0
  %327 = vmatmul.mubr.f32.gmra.mrb[0].mxu0 %v23
  %v328 = vpop.f32.mrb[0].mxu0
  %v329 = vadd.f32 %v260, %v328
  %v330 = vpop.f32.mrb[0].mxu0
  %331 = vmatprep.mubr.f32.mxu0 0.0
  %332 = vmatmul.mubr.f32.gmra.mrb[0].mxu0 %v24
  %v333 = vpop.f32.mrb[0].mxu0
  %v334 = vadd.f32 %v260, %v333
  %v335 = vpop.f32.mrb[0].mxu0
  %336 = vmatprep.mubr.f32.mxu0 0.0
  %337 = vmatmul.mubr.f32.gmra.mrb[0].mxu0 %v25
  %v338 = vpop.f32.mrb[0].mxu0
  %v339 = vadd.f32 %v260, %v338
  %v340 = vpop.f32.mrb[0].mxu0
  %341 = vmatprep.mubr.f32.mxu0 0.0
  %342 = vmatmul.mubr.f32.gmra.mrb[0].mxu0 %v26
  %v343 = vpop.f32.mrb[0].mxu0
  %v344 = vadd.f32 %v260, %v343
  %v345 = vpop.f32.mrb[0].mxu0
  %346 = vmatprep.mubr.f32.mxu0 0.0
  %347 = vmatmul.mubr.f32.gmra.mrb[0].mxu0 %v27
  %v348 = vpop.f32.mrb[0].mxu0
  %v349 = vadd.f32 %v260, %v348
  %v350 = vpop.f32.mrb[0].mxu0
  %351 = vmatprep.mubr.f32.mxu0 0.0
  %352 = vmatmul.mubr.f32.gmra.mrb[0].mxu0 %v28
  %v353 = vpop.f32.mrb[0].mxu0
  %v354 = vadd.f32 %v260, %v353
  %v355 = vpop.f32.mrb[0].mxu0
  %356 = vmatprep.mubr.f32.mxu0 0.0
  %357 = vmatmul.mubr.f32.gmra.mrb[0].mxu0 %v29
  %v358 = vpop.f32.mrb[0].mxu0
  %v359 = vadd.f32 %v260, %v358
  %v360 = vpop.f32.mrb[0].mxu0
  %361 = vmatprep.mubr.f32.mxu0 0.0
  %362 = vmatmul.mubr.f32.gmra.mrb[0].mxu0 %v30
  %v363 = vpop.f32.mrb[0].mxu0
  %v364 = vadd.f32 %v260, %v363
  %v365 = vpop.f32.mrb[0].mxu0
  %366 = vmatprep.mubr.f32.mxu0 0.0
  %367 = vmatmul.mubr.f32.gmra.mrb[0].mxu0 %v31
  %v368 = vpop.f32.mrb[0].mxu0
  %v369 = vadd.f32 %v260, %v368
  %v370 = vpop.f32.mrb[0].mxu0
  %371 = vmatprep.mubr.f32.mxu0 0.0
  %372 = vmatmul.mubr.f32.gmra.mrb[0].mxu0 %v32
  %v373 = vpop.f32.mrb[0].mxu0
  %v374 = vadd.f32 %v260, %v373
  %v375 = vpop.f32.mrb[0].mxu0
  %376 = vmatprep.mubr.f32.mxu0 0.0
  %377 = vmatmul.mubr.f32.gmra.mrb[0].mxu0 %v33
  %v378 = vpop.f32.mrb[0].mxu0
  %v379 = vadd.f32 %v260, %v378
  %v380 = vpop.f32.mrb[0].mxu0
  %381 = vmatprep.mubr.f32.mxu0 0.0
  %382 = vmatmul.mubr.f32.gmra.mrb[0].mxu0 %v34
  %v383 = vpop.f32.mrb[0].mxu0
  %v384 = vadd.f32 %v260, %v383
  %v385 = vpop.f32.mrb[0].mxu0
  %386 = vmatprep.mubr.f32.mxu0 0.0
  %387 = vmatmul.mubr.f32.gmra.mrb[0].mxu0 %v35
  %v388 = vpop.f32.mrb[0].mxu0
  %v389 = vadd.f32 %v260, %v388
  %v390 = vpop.f32.mrb[0].mxu0
  %391 = vmatprep.mubr.f32.mxu0 0.0
  %392 = vmatmul.mubr.f32.gmra.mrb[0].mxu0 %v36
  %v393 = vpop.f32.mrb[0].mxu0
  %v394 = vadd.f32 %v260, %v393
  %v395 = vpop.f32.mrb[0].mxu0
  %396 = vmatprep.mubr.f32.mxu0 0.0
  %397 = vmatmul.mubr.f32.gmra.mrb[0].mxu0 %v37
  %v398 = vpop.f32.mrb[0].mxu0
  %v399 = vadd.f32 %v260, %v398
  %v400 = vpop.f32.mrb[0].mxu0
  %401 = vmatprep.mubr.f32.mxu0 0.0
  %402 = vmatmul.mubr.f32.gmra.mrb[0].mxu0 %v38
  %v403 = vpop.f32.mrb[0].mxu0
  %v404 = vadd.f32 %v260, %v403
  %v405 = vpop.f32.mrb[0].mxu0
  %406 = vdwg.mxu0
  %v407 = vmax.f32 %v329, 0.0
  %v408 = vmax.f32 %v334, 0.0
  %v409 = vmax.f32 %v339, 0.0
  %v410 = vmax.f32 %v344, 0.0
  %v411 = vmax.f32 %v349, 0.0
  %v412 = vmax.f32 %v354, 0.0
  %v413 = vmax.f32 %v359, 0.0
  %v414 = vmax.f32 %v364, 0.0
  %v415 = vmax.f32 %v369, 0.0
  %v416 = vmax.f32 %v374, 0.0
  %v417 = vmax.f32 %v379, 0.0
  %v418 = vmax.f32 %v384, 0.0
  %v419 = vmax.f32 %v389, 0.0
  %v420 = vmax.f32 %v394, 0.0
  %v421 = vmax.f32 %v399, 0.0
  %v422 = vmax.f32 %v404, 0.0
  %v423 = vld [vmem:[%s4] sm:$0xff]
  %v424 = vld [vmem:[%s4 + $0x8] sm:$0xff]
  %v425 = vld [vmem:[%s4 + $0x10] sm:$0xff]
  %v426 = vld [vmem:[%s4 + $0x18] sm:$0xff]
  %vm427 = vcmask 261120
  %v429 = vsel %vm427, %v407, 0
  %v432 = vsel %vm427, %v408, 0
  %v435 = vsel %vm427, %v409, 0
  %v438 = vsel %vm427, %v410, 0
  %v441 = vsel %vm427, %v411, 0
  %v444 = vsel %vm427, %v412, 0
  %v447 = vsel %vm427, %v413, 0
  %v450 = vsel %vm427, %v414, 0
  %v453 = vsel %vm427, %v415, 0
  %v456 = vsel %vm427, %v416, 0
  %v459 = vsel %vm427, %v417, 0
  %v462 = vsel %vm427, %v418, 0
  %v465 = vsel %vm427, %v419, 0
  %v468 = vsel %vm427, %v420, 0
  %v471 = vsel %vm427, %v421, 0
  %v474 = vsel %vm427, %v422, 0
  %476 = vmatprep.subr.mxu0 0.0
  %477 = vmatpush1.msra.mxu0 %v423
  %478 = vmatprep.subr.mxu0 0.0
  %479 = vmatpush1.msra.mxu0 %v424
  %480 = vmatprep.subr.mxu0 0.0
  %481 = vmatpush1.msra.mxu0 %v425
  %482 = vmatprep.subr.mxu0 0.0
  %483 = vmatpush1.msra.mxu0 %v426
  %484 = vmatprep.subr.mxu0 0.0
  %485 = vmatpush1.msra.mxu0 0.0
  %486 = vmatprep.subr.mxu0 0.0
  %487 = vmatpush1.msra.mxu0 0.0
  %488 = vmatprep.subr.mxu0 0.0
  %489 = vmatpush1.msra.mxu0 0.0
  %490 = vmatprep.subr.mxu0 0.0
  %491 = vmatpush1.msra.mxu0 0.0
  %492 = vmatprep.subr.mxu0 0.0
  %493 = vmatpush1.msra.mxu0 0.0
  %494 = vmatprep.subr.mxu0 0.0
  %495 = vmatpush1.msra.mxu0 0.0
  %496 = vmatprep.subr.mxu0 0.0
  %497 = vmatpush1.msra.mxu0 0.0
  %498 = vmatprep.subr.mxu0 0.0
  %499 = vmatpush1.msra.mxu0 0.0
  %500 = vmatprep.subr.mxu0 0.0
  %501 = vmatpush1.msra.mxu0 0.0
  %502 = vmatprep.subr.mxu0 0.0
  %503 = vmatpush1.msra.mxu0 0.0
  %504 = vmatprep.subr.mxu0 0.0
  %505 = vmatpush1.msra.mxu0 0.0
  %506 = vmatprep.subr.mxu0 0.0
  %507 = vmatpush1.msra.mxu0 0.0
  %508 = vmatprep.subr.mxu0 0.0
  %509 = vmatpush1.msra.mxu0 0.0
  %510 = vmatprep.subr.mxu0 0.0
  %511 = vmatpush1.msra.mxu0 0.0
  %512 = vmatprep.subr.mxu0 0.0
  %513 = vmatpush1.msra.mxu0 0.0
  %514 = vmatprep.subr.mxu0 0.0
  %515 = vmatpush1.msra.mxu0 0.0
  %516 = vmatprep.subr.mxu0 0.0
  %517 = vmatpush1.msra.mxu0 0.0
  %518 = vmatprep.subr.mxu0 0.0
  %519 = vmatpush1.msra.mxu0 0.0
  %520 = vmatprep.subr.mxu0 0.0
  %521 = vmatpush1.msra.mxu0 0.0
  %522 = vmatprep.subr.mxu0 0.0
  %523 = vmatpush1.msra.mxu0 0.0
  %524 = vmatprep.subr.mxu0 0.0
  %525 = vmatpush1.msra.mxu0 0.0
  %526 = vmatprep.subr.mxu0 0.0
  %527 = vmatpush1.msra.mxu0 0.0
  %528 = vmatprep.subr.mxu0 0.0
  %529 = vmatpush1.msra.mxu0 0.0
  %530 = vmatprep.subr.mxu0 0.0
  %531 = vmatpush1.msra.mxu0 0.0
  %532 = vmatprep.subr.mxu0 0.0
  %533 = vmatpush1.msra.mxu0 0.0
  %534 = vmatprep.subr.mxu0 0.0
  %535 = vmatpush1.msra.mxu0 0.0
  %536 = vmatprep.subr.mxu0 0.0
  %537 = vmatpush1.msra.mxu0 0.0
  %538 = vmatprep.subr.mxu0 0.0
  %539 = vmatpush1.msra.mxu0 0.0
  %540 = vmatprep.mubr.f32.mxu0 0.0
  %541 = vmatmul.mubr.f32.gmra.mrb[0].mxu0 %v429
  %v542 = vpop.f32.mrb[0].mxu0
  %v543 = vadd.f32 0.0, %v542
  %v544 = vpop.f32.mrb[0].mxu0
  %545 = vmatprep.mubr.f32.mxu0 0.0
  %546 = vmatmul.mubr.f32.gmra.mrb[0].mxu0 %v432
  %v547 = vpop.f32.mrb[0].mxu0
  %v548 = vadd.f32 0.0, %v547
  %v549 = vpop.f32.mrb[0].mxu0
  %550 = vmatprep.mubr.f32.mxu0 0.0
  %551 = vmatmul.mubr.f32.gmra.mrb[0].mxu0 %v435
  %v552 = vpop.f32.mrb[0].mxu0
  %v553 = vadd.f32 0.0, %v552
  %v554 = vpop.f32.mrb[0].mxu0
  %555 = vmatprep.mubr.f32.mxu0 0.0
  %556 = vmatmul.mubr.f32.gmra.mrb[0].mxu0 %v438
  %v557 = vpop.f32.mrb[0].mxu0
  %v558 = vadd.f32 0.0, %v557
  %v559 = vpop.f32.mrb[0].mxu0
  %560 = vmatprep.mubr.f32.mxu0 0.0
  %561 = vmatmul.mubr.f32.gmra.mrb[0].mxu0 %v441
  %v562 = vpop.f32.mrb[0].mxu0
  %v563 = vadd.f32 0.0, %v562
  %v564 = vpop.f32.mrb[0].mxu0
  %565 = vmatprep.mubr.f32.mxu0 0.0
  %566 = vmatmul.mubr.f32.gmra.mrb[0].mxu0 %v444
  %v567 = vpop.f32.mrb[0].mxu0
  %v568 = vadd.f32 0.0, %v567
  %v569 = vpop.f32.mrb[0].mxu0
  %570 = vmatprep.mubr.f32.mxu0 0.0
  %571 = vmatmul.mubr.f32.gmra.mrb[0].mxu0 %v447
  %v572 = vpop.f32.mrb[0].mxu0
  %v573 = vadd.f32 0.0, %v572
  %v574 = vpop.f32.mrb[0].mxu0
  %575 = vmatprep.mubr.f32.mxu0 0.0
  %576 = vmatmul.mubr.f32.gmra.mrb[0].mxu0 %v450
  %v577 = vpop.f32.mrb[0].mxu0
  %v578 = vadd.f32 0.0, %v577
  %v579 = vpop.f32.mrb[0].mxu0
  %580 = vmatprep.mubr.f32.mxu0 0.0
  %581 = vmatmul.mubr.f32.gmra.mrb[0].mxu0 %v453
  %v582 = vpop.f32.mrb[0].mxu0
  %v583 = vadd.f32 0.0, %v582
  %v584 = vpop.f32.mrb[0].mxu0
  %585 = vmatprep.mubr.f32.mxu0 0.0
  %586 = vmatmul.mubr.f32.gmra.mrb[0].mxu0 %v456
  %v587 = vpop.f32.mrb[0].mxu0
  %v588 = vadd.f32 0.0, %v587
  %v589 = vpop.f32.mrb[0].mxu0
  %590 = vmatprep.mubr.f32.mxu0 0.0
  %591 = vmatmul.mubr.f32.gmra.mrb[0].mxu0 %v459
  %v592 = vpop.f32.mrb[0].mxu0
  %v593 = vadd.f32 0.0, %v592
  %v594 = vpop.f32.mrb[0].mxu0
  %595 = vmatprep.mubr.f32.mxu0 0.0
  %596 = vmatmul.mubr.f32.gmra.mrb[0].mxu0 %v462
  %v597 = vpop.f32.mrb[0].mxu0
  %v598 = vadd.f32 0.0, %v597
  %v599 = vpop.f32.mrb[0].mxu0
  %600 = vmatprep.mubr.f32.mxu0 0.0
  %601 = vmatmul.mubr.f32.gmra.mrb[0].mxu0 %v465
  %v602 = vpop.f32.mrb[0].mxu0
  %v603 = vadd.f32 0.0, %v602
  %v604 = vpop.f32.mrb[0].mxu0
  %605 = vmatprep.mubr.f32.mxu0 0.0
  %606 = vmatmul.mubr.f32.gmra.mrb[0].mxu0 %v468
  %v607 = vpop.f32.mrb[0].mxu0
  %v608 = vadd.f32 0.0, %v607
  %v609 = vpop.f32.mrb[0].mxu0
  %610 = vmatprep.mubr.f32.mxu0 0.0
  %611 = vmatmul.mubr.f32.gmra.mrb[0].mxu0 %v471
  %v612 = vpop.f32.mrb[0].mxu0
  %v613 = vadd.f32 0.0, %v612
  %v614 = vpop.f32.mrb[0].mxu0
  %615 = vmatprep.mubr.f32.mxu0 0.0
  %616 = vmatmul.mubr.f32.gmra.mrb[0].mxu0 %v474
  %v617 = vpop.f32.mrb[0].mxu0
  %v618 = vadd.f32 0.0, %v617
  %v619 = vpop.f32.mrb[0].mxu0
  %620 = vdwg.mxu0
  %v621 = vld [vmem:[%s5] sm:$0x1]
  %v623 = vlaneseq
  %v624 = vshrl.u32 %v623, 7
  %v625 = vsub.s32 0, %v624
  %v626 = vrot.slane %v621, %v625
  %628 = vmatprep.subr.mxu0 0.0
  %629 = vmatpush1.msra.mxu0 %v543
  %630 = vmatprep.subr.mxu0 0.0
  %631 = vmatpush1.msra.mxu0 %v548
  %632 = vmatprep.subr.mxu0 0.0
  %633 = vmatpush1.msra.mxu0 %v553
  %634 = vmatprep.subr.mxu0 0.0
  %635 = vmatpush1.msra.mxu0 %v558
  %636 = vmatprep.subr.mxu0 0.0
  %637 = vmatpush1.msra.mxu0 %v563
  %638 = vmatprep.subr.mxu0 0.0
  %639 = vmatpush1.msra.mxu0 %v568
  %640 = vmatprep.subr.mxu0 0.0
  %641 = vmatpush1.msra.mxu0 %v573
  %642 = vmatprep.subr.mxu0 0.0
  %643 = vmatpush1.msra.mxu0 %v578
  %644 = vmatprep.subr.mxu0 0.0
  %645 = vmatpush1.msra.mxu0 %v583
  %646 = vmatprep.subr.mxu0 0.0
  %647 = vmatpush1.msra.mxu0 %v588
  %648 = vmatprep.subr.mxu0 0.0
  %649 = vmatpush1.msra.mxu0 %v593
  %650 = vmatprep.subr.mxu0 0.0
  %651 = vmatpush1.msra.mxu0 %v598
  %652 = vmatprep.subr.mxu0 0.0
  %653 = vmatpush1.msra.mxu0 %v603
  %654 = vmatprep.subr.mxu0 0.0
  %655 = vmatpush1.msra.mxu0 %v608
  %656 = vmatprep.subr.mxu0 0.0
  %657 = vmatpush1.msra.mxu0 %v613
  %658 = vmatprep.subr.mxu0 0.0
  %659 = vmatpush1.msra.mxu0 %v618
  %660 = vmatprep.subr.mxu0 0.0
  %661 = vmatpush1.msra.mxu0 0.0
  %662 = vmatprep.subr.mxu0 0.0
  %663 = vmatpush1.msra.mxu0 0.0
  %664 = vmatprep.subr.mxu0 0.0
  %665 = vmatpush1.msra.mxu0 0.0
  %666 = vmatprep.subr.mxu0 0.0
  %667 = vmatpush1.msra.mxu0 0.0
  %668 = vmatprep.subr.mxu0 0.0
  %669 = vmatpush1.msra.mxu0 0.0
  %670 = vmatprep.subr.mxu0 0.0
  %671 = vmatpush1.msra.mxu0 0.0
  %672 = vmatprep.subr.mxu0 0.0
  %673 = vmatpush1.msra.mxu0 0.0
  %674 = vmatprep.subr.mxu0 0.0
  %675 = vmatpush1.msra.mxu0 0.0
  %676 = vmatprep.subr.mxu0 0.0
  %677 = vmatpush1.msra.mxu0 0.0
  %678 = vmatprep.subr.mxu0 0.0
  %679 = vmatpush1.msra.mxu0 0.0
  %680 = vmatprep.subr.mxu0 0.0
  %681 = vmatpush1.msra.mxu0 0.0
  %682 = vmatprep.subr.mxu0 0.0
  %683 = vmatpush1.msra.mxu0 0.0
  %684 = vmatprep.subr.mxu0 0.0
  %685 = vmatpush1.msra.mxu0 0.0
  %686 = vmatprep.subr.mxu0 0.0
  %687 = vmatpush1.msra.mxu0 0.0
  %688 = vmatprep.subr.mxu0 0.0
  %689 = vmatpush1.msra.mxu0 0.0
  %690 = vmatprep.subr.mxu0 0.0
  %691 = vmatpush1.msra.mxu0 0.0
  %692 = vmatprep.mubr.f32.mxu0 0.0
  %693 = vmatmul.mubr.f32.gmra.mrb[0].mxu0 %v23
  %v694 = vpop.f32.mrb[0].mxu0
  %v695 = vadd.f32 %v626, %v694
  %v696 = vpop.f32.mrb[0].mxu0
  %697 = vmatprep.mubr.f32.mxu0 0.0
  %698 = vmatmul.mubr.f32.gmra.mrb[0].mxu0 %v24
  %v699 = vpop.f32.mrb[0].mxu0
  %v700 = vadd.f32 %v626, %v699
  %v701 = vpop.f32.mrb[0].mxu0
  %702 = vmatprep.mubr.f32.mxu0 0.0
  %703 = vmatmul.mubr.f32.gmra.mrb[0].mxu0 %v25
  %v704 = vpop.f32.mrb[0].mxu0
  %v705 = vadd.f32 %v626, %v704
  %v706 = vpop.f32.mrb[0].mxu0
  %707 = vmatprep.mubr.f32.mxu0 0.0
  %708 = vmatmul.mubr.f32.gmra.mrb[0].mxu0 %v26
  %v709 = vpop.f32.mrb[0].mxu0
  %v710 = vadd.f32 %v626, %v709
  %v711 = vpop.f32.mrb[0].mxu0
  %712 = vmatprep.mubr.f32.mxu0 0.0
  %713 = vmatmul.mubr.f32.gmra.mrb[0].mxu0 %v27
  %v714 = vpop.f32.mrb[0].mxu0
  %v715 = vadd.f32 %v626, %v714
  %v716 = vpop.f32.mrb[0].mxu0
  %717 = vmatprep.mubr.f32.mxu0 0.0
  %718 = vmatmul.mubr.f32.gmra.mrb[0].mxu0 %v28
  %v719 = vpop.f32.mrb[0].mxu0
  %v720 = vadd.f32 %v626, %v719
  %v721 = vpop.f32.mrb[0].mxu0
  %722 = vmatprep.mubr.f32.mxu0 0.0
  %723 = vmatmul.mubr.f32.gmra.mrb[0].mxu0 %v29
  %v724 = vpop.f32.mrb[0].mxu0
  %v725 = vadd.f32 %v626, %v724
  %v726 = vpop.f32.mrb[0].mxu0
  %727 = vmatprep.mubr.f32.mxu0 0.0
  %728 = vmatmul.mubr.f32.gmra.mrb[0].mxu0 %v30
  %v729 = vpop.f32.mrb[0].mxu0
  %v730 = vadd.f32 %v626, %v729
  %v731 = vpop.f32.mrb[0].mxu0
  %732 = vmatprep.mubr.f32.mxu0 0.0
  %733 = vmatmul.mubr.f32.gmra.mrb[0].mxu0 %v31
  %v734 = vpop.f32.mrb[0].mxu0
  %v735 = vadd.f32 %v626, %v734
  %v736 = vpop.f32.mrb[0].mxu0
  %737 = vmatprep.mubr.f32.mxu0 0.0
  %738 = vmatmul.mubr.f32.gmra.mrb[0].mxu0 %v32
  %v739 = vpop.f32.mrb[0].mxu0
  %v740 = vadd.f32 %v626, %v739
  %v741 = vpop.f32.mrb[0].mxu0
  %742 = vmatprep.mubr.f32.mxu0 0.0
  %743 = vmatmul.mubr.f32.gmra.mrb[0].mxu0 %v33
  %v744 = vpop.f32.mrb[0].mxu0
  %v745 = vadd.f32 %v626, %v744
  %v746 = vpop.f32.mrb[0].mxu0
  %747 = vmatprep.mubr.f32.mxu0 0.0
  %748 = vmatmul.mubr.f32.gmra.mrb[0].mxu0 %v34
  %v749 = vpop.f32.mrb[0].mxu0
  %v750 = vadd.f32 %v626, %v749
  %v751 = vpop.f32.mrb[0].mxu0
  %752 = vmatprep.mubr.f32.mxu0 0.0
  %753 = vmatmul.mubr.f32.gmra.mrb[0].mxu0 %v35
  %v754 = vpop.f32.mrb[0].mxu0
  %v755 = vadd.f32 %v626, %v754
  %v756 = vpop.f32.mrb[0].mxu0
  %757 = vmatprep.mubr.f32.mxu0 0.0
  %758 = vmatmul.mubr.f32.gmra.mrb[0].mxu0 %v36
  %v759 = vpop.f32.mrb[0].mxu0
  %v760 = vadd.f32 %v626, %v759
  %v761 = vpop.f32.mrb[0].mxu0
  %762 = vmatprep.mubr.f32.mxu0 0.0
  %763 = vmatmul.mubr.f32.gmra.mrb[0].mxu0 %v37
  %v764 = vpop.f32.mrb[0].mxu0
  %v765 = vadd.f32 %v626, %v764
  %v766 = vpop.f32.mrb[0].mxu0
  %767 = vmatprep.mubr.f32.mxu0 0.0
  %768 = vmatmul.mubr.f32.gmra.mrb[0].mxu0 %v38
  %v769 = vpop.f32.mrb[0].mxu0
  %v770 = vadd.f32 %v626, %v769
  %v771 = vpop.f32.mrb[0].mxu0
  %772 = vdwg.mxu0
  %v773 = vlaneseq
  %v774 = vand.u32 %v773, 127
  %vm775 = vcmp.lt.s32.totalorder %v774, 21
  %vm776 = vcmp.ge.s32.totalorder %v774, 21
  %vm777 = vcmp.lt.s32.totalorder %v774, 23
  %vm778 = vmand %vm776, %vm777
  %v779 = vsel %vm777, %v695, -inf
  %v780 = vsel %vm777, %v700, -inf
  %v781 = vsel %vm777, %v705, -inf
  %v782 = vsel %vm777, %v710, -inf
  %v783 = vsel %vm777, %v715, -inf
  %v784 = vsel %vm777, %v720, -inf
  %v785 = vsel %vm777, %v725, -inf
  %v786 = vsel %vm777, %v730, -inf
  %v787 = vsel %vm777, %v735, -inf
  %v788 = vsel %vm777, %v740, -inf
  %v789 = vsel %vm777, %v745, -inf
  %v790 = vsel %vm777, %v750, -inf
  %v791 = vsel %vm777, %v755, -inf
  %v792 = vsel %vm777, %v760, -inf
  %v793 = vsel %vm777, %v765, -inf
  %v794 = vsel %vm777, %v770, -inf
  %795 = vmax.xlane.f32.xlu0 %v779
  %v796 = vpop.xlane.xlu0 %795
  %797 = vmax.xlane.f32.xlu0 %v780
  %v798 = vpop.xlane.xlu0 %797
  %799 = vmax.xlane.f32.xlu0 %v781
  %v800 = vpop.xlane.xlu0 %799
  %801 = vmax.xlane.f32.xlu0 %v782
  %v802 = vpop.xlane.xlu0 %801
  %803 = vmax.xlane.f32.xlu0 %v783
  %v804 = vpop.xlane.xlu0 %803
  %805 = vmax.xlane.f32.xlu0 %v784
  %v806 = vpop.xlane.xlu0 %805
  %807 = vmax.xlane.f32.xlu0 %v785
  %v808 = vpop.xlane.xlu0 %807
  %809 = vmax.xlane.f32.xlu0 %v786
  %v810 = vpop.xlane.xlu0 %809
  %811 = vmax.xlane.f32.xlu0 %v787
  %v812 = vpop.xlane.xlu0 %811
  %813 = vmax.xlane.f32.xlu0 %v788
  %v814 = vpop.xlane.xlu0 %813
  %815 = vmax.xlane.f32.xlu0 %v789
  %v816 = vpop.xlane.xlu0 %815
  %817 = vmax.xlane.f32.xlu0 %v790
  %v818 = vpop.xlane.xlu0 %817
  %819 = vmax.xlane.f32.xlu0 %v791
  %v820 = vpop.xlane.xlu0 %819
  %821 = vmax.xlane.f32.xlu0 %v792
  %v822 = vpop.xlane.xlu0 %821
  %823 = vmax.xlane.f32.xlu0 %v793
  %v824 = vpop.xlane.xlu0 %823
  %825 = vmax.xlane.f32.xlu0 %v794
  %v826 = vpop.xlane.xlu0 %825
  %v827 = vsub.f32 %v695, %v796
  %v828 = vsub.f32 %v700, %v798
  %v829 = vsub.f32 %v705, %v800
  %v830 = vsub.f32 %v710, %v802
  %v831 = vsub.f32 %v715, %v804
  %v832 = vsub.f32 %v720, %v806
  %v833 = vsub.f32 %v725, %v808
  %v834 = vsub.f32 %v730, %v810
  %v835 = vsub.f32 %v735, %v812
  %v836 = vsub.f32 %v740, %v814
  %v837 = vsub.f32 %v745, %v816
  %v838 = vsub.f32 %v750, %v818
  %v839 = vsub.f32 %v755, %v820
  %v840 = vsub.f32 %v760, %v822
  %v841 = vsub.f32 %v765, %v824
  %v842 = vsub.f32 %v770, %v826
  %v843 = vmul.f32 %v827, 1.442695
  %v844 = vpow.pop %v843
  %v845 = vmul.f32 %v828, 1.442695
  %v846 = vpow.pop %v845
  %v847 = vmul.f32 %v829, 1.442695
  %v848 = vpow.pop %v847
  %v849 = vmul.f32 %v830, 1.442695
  %v850 = vpow.pop %v849
  %v851 = vmul.f32 %v831, 1.442695
  %v852 = vpow.pop %v851
  %v853 = vmul.f32 %v832, 1.442695
  %v854 = vpow.pop %v853
  %v855 = vmul.f32 %v833, 1.442695
  %v856 = vpow.pop %v855
  %v857 = vmul.f32 %v834, 1.442695
  %v858 = vpow.pop %v857
  %v859 = vmul.f32 %v835, 1.442695
  %v860 = vpow.pop %v859
  %v861 = vmul.f32 %v836, 1.442695
  %v862 = vpow.pop %v861
  %v863 = vmul.f32 %v837, 1.442695
  %v864 = vpow.pop %v863
  %v865 = vmul.f32 %v838, 1.442695
  %v866 = vpow.pop %v865
  %v867 = vmul.f32 %v839, 1.442695
  %v868 = vpow.pop %v867
  %v869 = vmul.f32 %v840, 1.442695
  %v870 = vpow.pop %v869
  %v871 = vmul.f32 %v841, 1.442695
  %v872 = vpow.pop %v871
  %v873 = vmul.f32 %v842, 1.442695
  %v874 = vpow.pop %v873
  %v875 = vsel %vm775, %v844, 0.0
  %v876 = vsel %vm775, %v846, 0.0
  %v877 = vsel %vm775, %v848, 0.0
  %v878 = vsel %vm775, %v850, 0.0
  %v879 = vsel %vm775, %v852, 0.0
  %v880 = vsel %vm775, %v854, 0.0
  %v881 = vsel %vm775, %v856, 0.0
  %v882 = vsel %vm775, %v858, 0.0
  %v883 = vsel %vm775, %v860, 0.0
  %v884 = vsel %vm775, %v862, 0.0
  %v885 = vsel %vm775, %v864, 0.0
  %v886 = vsel %vm775, %v866, 0.0
  %v887 = vsel %vm775, %v868, 0.0
  %v888 = vsel %vm775, %v870, 0.0
  %v889 = vsel %vm775, %v872, 0.0
  %v890 = vsel %vm775, %v874, 0.0
  %891 = vadd.xlane.f32.xlu0 %v875
  %v892 = vpop.xlane.xlu0 %891
  %893 = vadd.xlane.f32.xlu0 %v876
  %v894 = vpop.xlane.xlu0 %893
  %895 = vadd.xlane.f32.xlu0 %v877
  %v896 = vpop.xlane.xlu0 %895
  %897 = vadd.xlane.f32.xlu0 %v878
  %v898 = vpop.xlane.xlu0 %897
  %899 = vadd.xlane.f32.xlu0 %v879
  %v900 = vpop.xlane.xlu0 %899
  %901 = vadd.xlane.f32.xlu0 %v880
  %v902 = vpop.xlane.xlu0 %901
  %903 = vadd.xlane.f32.xlu0 %v881
  %v904 = vpop.xlane.xlu0 %903
  %905 = vadd.xlane.f32.xlu0 %v882
  %v906 = vpop.xlane.xlu0 %905
  %907 = vadd.xlane.f32.xlu0 %v883
  %v908 = vpop.xlane.xlu0 %907
  %909 = vadd.xlane.f32.xlu0 %v884
  %v910 = vpop.xlane.xlu0 %909
  %911 = vadd.xlane.f32.xlu0 %v885
  %v912 = vpop.xlane.xlu0 %911
  %913 = vadd.xlane.f32.xlu0 %v886
  %v914 = vpop.xlane.xlu0 %913
  %915 = vadd.xlane.f32.xlu0 %v887
  %v916 = vpop.xlane.xlu0 %915
  %917 = vadd.xlane.f32.xlu0 %v888
  %v918 = vpop.xlane.xlu0 %917
  %919 = vadd.xlane.f32.xlu0 %v889
  %v920 = vpop.xlane.xlu0 %919
  %921 = vadd.xlane.f32.xlu0 %v890
  %v922 = vpop.xlane.xlu0 %921
  %v923 = vsel %vm778, %v844, 0.0
  %v924 = vsel %vm778, %v846, 0.0
  %v925 = vsel %vm778, %v848, 0.0
  %v926 = vsel %vm778, %v850, 0.0
  %v927 = vsel %vm778, %v852, 0.0
  %v928 = vsel %vm778, %v854, 0.0
  %v929 = vsel %vm778, %v856, 0.0
  %v930 = vsel %vm778, %v858, 0.0
  %v931 = vsel %vm778, %v860, 0.0
  %v932 = vsel %vm778, %v862, 0.0
  %v933 = vsel %vm778, %v864, 0.0
  %v934 = vsel %vm778, %v866, 0.0
  %v935 = vsel %vm778, %v868, 0.0
  %v936 = vsel %vm778, %v870, 0.0
  %v937 = vsel %vm778, %v872, 0.0
  %v938 = vsel %vm778, %v874, 0.0
  %939 = vadd.xlane.f32.xlu0 %v923
  %v940 = vpop.xlane.xlu0 %939
  %941 = vadd.xlane.f32.xlu0 %v924
  %v942 = vpop.xlane.xlu0 %941
  %943 = vadd.xlane.f32.xlu0 %v925
  %v944 = vpop.xlane.xlu0 %943
  %945 = vadd.xlane.f32.xlu0 %v926
  %v946 = vpop.xlane.xlu0 %945
  %947 = vadd.xlane.f32.xlu0 %v927
  %v948 = vpop.xlane.xlu0 %947
  %949 = vadd.xlane.f32.xlu0 %v928
  %v950 = vpop.xlane.xlu0 %949
  %951 = vadd.xlane.f32.xlu0 %v929
  %v952 = vpop.xlane.xlu0 %951
  %953 = vadd.xlane.f32.xlu0 %v930
  %v954 = vpop.xlane.xlu0 %953
  %955 = vadd.xlane.f32.xlu0 %v931
  %v956 = vpop.xlane.xlu0 %955
  %957 = vadd.xlane.f32.xlu0 %v932
  %v958 = vpop.xlane.xlu0 %957
  %959 = vadd.xlane.f32.xlu0 %v933
  %v960 = vpop.xlane.xlu0 %959
  %961 = vadd.xlane.f32.xlu0 %v934
  %v962 = vpop.xlane.xlu0 %961
  %963 = vadd.xlane.f32.xlu0 %v935
  %v964 = vpop.xlane.xlu0 %963
  %965 = vadd.xlane.f32.xlu0 %v936
  %v966 = vpop.xlane.xlu0 %965
  %967 = vadd.xlane.f32.xlu0 %v937
  %v968 = vpop.xlane.xlu0 %967
  %969 = vadd.xlane.f32.xlu0 %v938
  %v970 = vpop.xlane.xlu0 %969
  %v971 = vrcp.pop %v892
  %v972 = vrcp.pop %v894
  %v973 = vrcp.pop %v896
  %v974 = vrcp.pop %v898
  %v975 = vrcp.pop %v900
  %v976 = vrcp.pop %v902
  %v977 = vrcp.pop %v904
  %v978 = vrcp.pop %v906
  %v979 = vrcp.pop %v908
  %v980 = vrcp.pop %v910
  %v981 = vrcp.pop %v912
  %v982 = vrcp.pop %v914
  %v983 = vrcp.pop %v916
  %v984 = vrcp.pop %v918
  %v985 = vrcp.pop %v920
  %v986 = vrcp.pop %v922
  %v987 = vrcp.pop %v940
  %v988 = vrcp.pop %v942
  %v989 = vrcp.pop %v944
  %v990 = vrcp.pop %v946
  %v991 = vrcp.pop %v948
  %v992 = vrcp.pop %v950
  %v993 = vrcp.pop %v952
  %v994 = vrcp.pop %v954
  %v995 = vrcp.pop %v956
  %v996 = vrcp.pop %v958
  %v997 = vrcp.pop %v960
  %v998 = vrcp.pop %v962
  %v999 = vrcp.pop %v964
  %v1000 = vrcp.pop %v966
  %v1001 = vrcp.pop %v968
  %v1002 = vrcp.pop %v970
  %v1003 = vmul.f32 %v844, %v971
  %v1004 = vmul.f32 %v846, %v972
  %v1005 = vmul.f32 %v848, %v973
  %v1006 = vmul.f32 %v850, %v974
  %v1007 = vmul.f32 %v852, %v975
  %v1008 = vmul.f32 %v854, %v976
  %v1009 = vmul.f32 %v856, %v977
  %v1010 = vmul.f32 %v858, %v978
  %v1011 = vmul.f32 %v860, %v979
  %v1012 = vmul.f32 %v862, %v980
  %v1013 = vmul.f32 %v864, %v981
  %v1014 = vmul.f32 %v866, %v982
  %v1015 = vmul.f32 %v868, %v983
  %v1016 = vmul.f32 %v870, %v984
  %v1017 = vmul.f32 %v872, %v985
  %v1018 = vmul.f32 %v874, %v986
  %v1019 = vmul.f32 %v844, %v987
  %v1020 = vmul.f32 %v846, %v988
  %v1021 = vmul.f32 %v848, %v989
  %v1022 = vmul.f32 %v850, %v990
  %v1023 = vmul.f32 %v852, %v991
  %v1024 = vmul.f32 %v854, %v992
  %v1025 = vmul.f32 %v856, %v993
  %v1026 = vmul.f32 %v858, %v994
  %v1027 = vmul.f32 %v860, %v995
  %v1028 = vmul.f32 %v862, %v996
  %v1029 = vmul.f32 %v864, %v997
  %v1030 = vmul.f32 %v866, %v998
  %v1031 = vmul.f32 %v868, %v999
  %v1032 = vmul.f32 %v870, %v1000
  %v1033 = vmul.f32 %v872, %v1001
  %v1034 = vmul.f32 %v874, %v1002
  %v1035 = vsel %vm778, %v1019, 0.0
  %v1036 = vsel %vm778, %v1020, 0.0
  %v1037 = vsel %vm778, %v1021, 0.0
  %v1038 = vsel %vm778, %v1022, 0.0
  %v1039 = vsel %vm778, %v1023, 0.0
  %v1040 = vsel %vm778, %v1024, 0.0
  %v1041 = vsel %vm778, %v1025, 0.0
  %v1042 = vsel %vm778, %v1026, 0.0
  %v1043 = vsel %vm778, %v1027, 0.0
  %v1044 = vsel %vm778, %v1028, 0.0
  %v1045 = vsel %vm778, %v1029, 0.0
  %v1046 = vsel %vm778, %v1030, 0.0
  %v1047 = vsel %vm778, %v1031, 0.0
  %v1048 = vsel %vm778, %v1032, 0.0
  %v1049 = vsel %vm778, %v1033, 0.0
  %v1050 = vsel %vm778, %v1034, 0.0
  %v1051 = vsel %vm775, %v1003, %v1035
  %v1052 = vsel %vm775, %v1004, %v1036
  %v1053 = vsel %vm775, %v1005, %v1037
  %v1054 = vsel %vm775, %v1006, %v1038
  %v1055 = vsel %vm775, %v1007, %v1039
  %v1056 = vsel %vm775, %v1008, %v1040
  %v1057 = vsel %vm775, %v1009, %v1041
  %v1058 = vsel %vm775, %v1010, %v1042
  %v1059 = vsel %vm775, %v1011, %v1043
  %v1060 = vsel %vm775, %v1012, %v1044
  %v1061 = vsel %vm775, %v1013, %v1045
  %v1062 = vsel %vm775, %v1014, %v1046
  %v1063 = vsel %vm775, %v1015, %v1047
  %v1064 = vsel %vm775, %v1016, %v1048
  %v1065 = vsel %vm775, %v1017, %v1049
  %v1066 = vsel %vm775, %v1018, %v1050
  %1067 = vst [vmem:[%s6] sm:$0xff] %v1051
  %1068 = vst [vmem:[%s6 + $0x8] sm:$0xff] %v1052
  %1069 = vst [vmem:[%s6 + $0x10] sm:$0xff] %v1053
  %1070 = vst [vmem:[%s6 + $0x18] sm:$0xff] %v1054
  %1071 = vst [vmem:[%s6 + $0x20] sm:$0xff] %v1055
  %1072 = vst [vmem:[%s6 + $0x28] sm:$0xff] %v1056
  %1073 = vst [vmem:[%s6 + $0x30] sm:$0xff] %v1057
  %1074 = vst [vmem:[%s6 + $0x38] sm:$0xff] %v1058
  %1075 = vst [vmem:[%s6 + $0x40] sm:$0xff] %v1059
  %1076 = vst [vmem:[%s6 + $0x48] sm:$0xff] %v1060
  %1077 = vst [vmem:[%s6 + $0x50] sm:$0xff] %v1061
  %1078 = vst [vmem:[%s6 + $0x58] sm:$0xff] %v1062
  %1079 = vst [vmem:[%s6 + $0x60] sm:$0xff] %v1063
  %1080 = vst [vmem:[%s6 + $0x68] sm:$0xff] %v1064
  %1081 = vst [vmem:[%s6 + $0x70] sm:$0xff] %v1065
  %1082 = vst [vmem:[%s6 + $0x78] sm:$0xff] %v1066
  // Predicated region
  $region26: #{gnn_forward.1} parent=0 // pred_check
    _
  $region27: #{gnn_forward.1} parent=0 // pred_check_branch
    %1084 = sbr.rel (0) target = $region29
  $region28: #{gnn_forward.1} parent=0 // pred_region
    _
  $region29: #{gnn_forward.1} parent=0 // pred_fallthru
    _
  // Predicated region
  $region30: #{gnn_forward.1} parent=0 // pred_check
    _
  $region31: #{gnn_forward.1} parent=0 // pred_check_branch
    %1086 = sbr.rel (0) target = $region33
  $region32: #{gnn_forward.1} parent=0 // pred_region
    _
  $region33: #{gnn_forward.1} parent=0 // pred_fallthru
    _

</llo_original>
